<compile_context>
chip_gen: v6e
topology: v6e:2x2x1
jax: 0.10.0
libtpu: 0.0.40
codegen_flags: <defaults>
</compile_context>

<pallas_src>
import functools

import jax
import jax.numpy as jnp
from jax.experimental import pallas as pl
from jax.experimental.pallas import tpu as pltpu

LANE = 128


def _round_up(x, m):
    return (x + m - 1) // m * m


def _pad2(x, rows, cols):
    r, c = x.shape
    return jnp.pad(x, ((0, rows - r), (0, cols - c)))


def _pick_tiles(n, tm_target=512, tk_target=4096):
    """Pad N and pick (row tile tm, contraction tile tk) dividing n_pad."""
    if n <= tk_target:
        n_pad = _round_up(n, 256)
        tk = n_pad                       # whole contraction in one A block
    else:
        n_pad = _round_up(n, tk_target)
        tk = tk_target
    tm = min(tm_target, n_pad)
    while n_pad % tm:
        tm -= LANE
    # v7x megacore: keep >= 2 row steps so both TensorCores get work.
    if n_pad // tm < 2 and n_pad >= 2 * LANE:
        tm = n_pad // 2
    return n_pad, tm, tk


# ----------------------------------------------------------------------------
# Kernel 1: feature transform  XW0 = X @ W0   (W0 small, lane-padded, resident)
# ----------------------------------------------------------------------------
def _transform_kernel(x_ref, w_ref, o_ref):
    o_ref[...] = jnp.dot(
        x_ref[...], w_ref[...], preferred_element_type=jnp.float32
    ).astype(o_ref.dtype)


def _transform(x, w, tile):
    n, f = x.shape
    p = w.shape[1]
    return pl.pallas_call(
        _transform_kernel,
        out_shape=jax.ShapeDtypeStruct((n, p), jnp.bfloat16),
        grid_spec=pltpu.PrefetchScalarGridSpec(
            num_scalar_prefetch=0,
            grid=(n // tile,),
            in_specs=[
                pl.BlockSpec((tile, f), lambda i: (i, 0)),
                pl.BlockSpec((f, p), lambda i: (0, 0)),
            ],
            out_specs=pl.BlockSpec((tile, p), lambda i: (i, 0)),
        ),
        compiler_params=pltpu.CompilerParams(dimension_semantics=("parallel",)),
        cost_estimate=pl.CostEstimate(
            flops=2 * n * f * p,
            transcendentals=0,
            bytes_accessed=2 * n * f + 2 * f * p + 2 * n * p,
        ),
    )(x, w)


# ----------------------------------------------------------------------------
# Kernel 2: fused layer 0 + layer-1 transform   HW1 = relu(A @ XW0) @ W1
#   A streamed (tm, tk); XW0 / W1 fully VMEM-resident (constant index_map).
# ----------------------------------------------------------------------------
def _layer0_kernel(a_ref, xw_ref, w1_ref, o_ref, acc_ref, *, tk):
    k = pl.program_id(1)

    @pl.when(k == 0)
    def _():
        acc_ref[...] = jnp.zeros_like(acc_ref)

    off = pl.multiple_of(k * tk, tk)
    acc_ref[...] += jnp.dot(
        a_ref[...], xw_ref[pl.ds(off, tk), :], preferred_element_type=jnp.float32
    )

    @pl.when(k == pl.num_programs(1) - 1)
    def _():
        h1 = jnp.maximum(acc_ref[...], 0.0).astype(w1_ref.dtype)   # relu, bf16
        o_ref[...] = jnp.dot(
            h1, w1_ref[...], preferred_element_type=jnp.float32
        ).astype(o_ref.dtype)


def _layer0(a, xw, w1, tm, tk, vmem_limit):
    n = a.shape[0]
    hp = xw.shape[1]
    cp = w1.shape[1]
    kernel = functools.partial(_layer0_kernel, tk=tk)
    return pl.pallas_call(
        kernel,
        out_shape=jax.ShapeDtypeStruct((n, cp), jnp.bfloat16),
        grid_spec=pltpu.PrefetchScalarGridSpec(
            num_scalar_prefetch=0,
            grid=(n // tm, n // tk),
            in_specs=[
                pl.BlockSpec((tm, tk), lambda i, k: (i, k)),   # A (streamed)
                pl.BlockSpec((n, hp), lambda i, k: (0, 0)),    # XW0 (resident)
                pl.BlockSpec((hp, cp), lambda i, k: (0, 0)),   # W1  (resident)
            ],
            out_specs=pl.BlockSpec((tm, cp), lambda i, k: (i, 0)),
            scratch_shapes=[pltpu.VMEM((tm, hp), jnp.float32)],
        ),
        compiler_params=pltpu.CompilerParams(
            dimension_semantics=("parallel", "arbitrary"),
            vmem_limit_bytes=vmem_limit,
        ),
        cost_estimate=pl.CostEstimate(
            flops=2 * n * n * hp + 2 * n * hp * cp,
            transcendentals=0,
            bytes_accessed=2 * n * n + 2 * n * hp + 2 * hp * cp + 2 * n * cp,
        ),
    )(a, xw, w1)


# ----------------------------------------------------------------------------
# Kernel 3: layer-1 aggregate + masked row softmax   out = softmax(A @ HW1)
# ----------------------------------------------------------------------------
def _layer1_kernel(a_ref, b_ref, o_ref, acc_ref, *, tk, valid_cols):
    k = pl.program_id(1)

    @pl.when(k == 0)
    def _():
        acc_ref[...] = jnp.zeros_like(acc_ref)

    off = pl.multiple_of(k * tk, tk)
    acc_ref[...] += jnp.dot(
        a_ref[...], b_ref[pl.ds(off, tk), :], preferred_element_type=jnp.float32
    )

    @pl.when(k == pl.num_programs(1) - 1)
    def _():
        acc = acc_ref[...]
        cols = jax.lax.broadcasted_iota(jnp.int32, acc.shape, 1)
        logits = jnp.where(cols < valid_cols, acc, -1e30)
        m = jnp.max(logits, axis=-1, keepdims=True)
        e = jnp.exp(logits - m)
        denom = jnp.sum(e, axis=-1, keepdims=True)
        # Exact division (runs once per output tile, essentially free) so
        # every row sums to 1 to f32 precision.
        o_ref[...] = (e / denom).astype(o_ref.dtype)


def _layer1(a, b, tm, tk, valid_cols, vmem_limit):
    n = a.shape[0]
    cp = b.shape[1]
    kernel = functools.partial(_layer1_kernel, tk=tk, valid_cols=valid_cols)
    return pl.pallas_call(
        kernel,
        out_shape=jax.ShapeDtypeStruct((n, cp), jnp.float32),
        grid_spec=pltpu.PrefetchScalarGridSpec(
            num_scalar_prefetch=0,
            grid=(n // tm, n // tk),
            in_specs=[
                pl.BlockSpec((tm, tk), lambda i, k: (i, k)),   # A (streamed)
                pl.BlockSpec((n, cp), lambda i, k: (0, 0)),    # HW1 (resident)
            ],
            out_specs=pl.BlockSpec((tm, cp), lambda i, k: (i, 0)),
            scratch_shapes=[pltpu.VMEM((tm, cp), jnp.float32)],
        ),
        compiler_params=pltpu.CompilerParams(
            dimension_semantics=("parallel", "arbitrary"),
            vmem_limit_bytes=vmem_limit,
        ),
        cost_estimate=pl.CostEstimate(
            flops=2 * n * n * cp,
            transcendentals=n * cp,
            bytes_accessed=2 * n * n + 2 * n * cp + 4 * n * cp,
        ),
    )(a, b)


# ----------------------------------------------------------------------------
# Full GCN forward
# ----------------------------------------------------------------------------
def gcn_forward(adj, x, w0, w1, *, tm_target=512, tk_target=4096):
    """out = softmax(A @ (relu(A @ (X @ W0)) @ W1), axis=1)."""
    n, f_in = x.shape
    h = w0.shape[1]
    c = w1.shape[1]

    n_pad, tm, tk = _pick_tiles(n, tm_target, tk_target)
    hp = _round_up(h, LANE)
    cp = _round_up(c, LANE)

    # bf16 at the boundary; matmuls accumulate in f32, softmax math stays f32.
    a16 = _pad2(adj, n_pad, n_pad).astype(jnp.bfloat16)
    x16 = _pad2(x, n_pad, f_in).astype(jnp.bfloat16)
    w0_16 = _pad2(w0, f_in, hp).astype(jnp.bfloat16)
    w1_16 = _pad2(w1, hp, cp).astype(jnp.bfloat16)

    # VMEM budget: double-buffered A tiles + resident B slab + W1 + out + acc.
    def vmem_limit(p, out_itemsize):
        need = (2 * tm * tk * 2          # A double buffers
                + 2 * n_pad * p * 2      # resident B slab (buffer pair)
                + 2 * hp * cp * 2        # resident W1
                + 2 * tm * p * out_itemsize
                + tm * hp * 4            # f32 accumulator
                + (2 << 20))             # slack
        return int(min(max(need, 32 << 20), 64 << 20))

    # Transform gets its own (large) row tile.
    tt = min(2048, n_pad)
    while n_pad % tt:
        tt -= LANE

    xw0 = _transform(x16, w0_16, tt)                               # [n_pad, hp] bf16
    hw1 = _layer0(a16, xw0, w1_16, tm, tk, vmem_limit(hp, 2))      # [n_pad, cp] bf16
    out = _layer1(a16, hw1, tm, tk, c, vmem_limit(cp, 4))          # [n_pad, cp] f32
    return out[:n, :c]


def _glorot(key, shape):
    limit = jnp.sqrt(6.0 / (shape[0] + shape[1]))
    return jax.random.uniform(key, shape, jnp.float32, -limit, limit)


if __name__ == "__main__":
    # Small shapes consistent with the module: N nodes, input_dim, hidden1=16,
    # output classes.  N deliberately NOT a tile multiple to exercise padding.
    N, F_IN, HID, C = 200, 32, 16, 8

    key = jax.random.PRNGKey(0)
    k_x, k_a, k_w0, k_w1 = jax.random.split(key, 4)

    # Node features
    x = jax.random.normal(k_x, (N, F_IN), jnp.float32)

    # Symmetric normalized adjacency  A_hat = D^-1/2 (A + I) D^-1/2
    raw = (jax.random.uniform(k_a, (N, N)) < 0.05).astype(jnp.float32)
    raw = jnp.maximum(raw, raw.T)                      # symmetrize
    raw = raw + jnp.eye(N, dtype=jnp.float32)          # self loops
    deg = jnp.sum(raw, axis=1)
    d_inv_sqrt = 1.0 / jnp.sqrt(deg)
    adj = raw * d_inv_sqrt[:, None] * d_inv_sqrt[None, :]

    # Deterministic Glorot-initialized weights (shapes from GraphConvolution)
    w0 = _glorot(k_w0, (F_IN, HID))   # layer 0: input_dim -> hidden1
    w1 = _glorot(k_w1, (HID, C))      # layer 1: hidden1 -> output_dim

    out = jax.block_until_ready(gcn_forward(adj, x, w0, w1))
    assert out.shape == (N, C)

    # Reference mirroring the kernel's bf16-operand / f32-accumulate matmuls.
    a16 = adj.astype(jnp.bfloat16)
    xw0_r = jnp.dot(x.astype(jnp.bfloat16), w0.astype(jnp.bfloat16),
                    preferred_element_type=jnp.float32)
    h1_r = jnp.maximum(jnp.dot(a16, xw0_r.astype(jnp.bfloat16),
                               preferred_element_type=jnp.float32), 0.0)
    hw1_r = jnp.dot(h1_r.astype(jnp.bfloat16), w1.astype(jnp.bfloat16),
                    preferred_element_type=jnp.float32)
    logits_r = jnp.dot(a16, hw1_r.astype(jnp.bfloat16),
                       preferred_element_type=jnp.float32)
    ref = jax.nn.softmax(logits_r, axis=1)
    assert jnp.allclose(out, ref, atol=2e-3, rtol=2e-3)

    # Loose sanity check against the pure-f32 reference of the same forward.
    h1_f = jnp.maximum(adj @ (x @ w0), 0.0)
    ref_f = jax.nn.softmax(adj @ (h1_f @ w1), axis=1)
    assert jnp.allclose(out, ref_f, atol=1e-1)
    # Exact division in the softmax finalize -> rows sum to 1 (f32 precision).
    assert jnp.allclose(jnp.sum(out, axis=1), 1.0, atol=2e-3)

    print("KERNEL_OK")
</pallas_src>

<mosaic_0001>
module attributes {stable_mosaic.version = 11 : i64} {
  func.func @_transform_kernel(%arg0: i32, %arg1: memref<256x32xbf16, #tpu.memory_space<vmem>>, %arg2: memref<32x128xbf16, #tpu.memory_space<vmem>>, %arg3: memref<256x128xbf16, #tpu.memory_space<vmem>>) attributes {dimension_semantics = [#tpu.dimension_semantics<parallel>], iteration_bounds = array<i64: 1>, scalar_prefetch = 0 : i64, scratch_operands = 0 : i64, tpu.core_type = #tpu.core_type<tc>, window_params = [{transform_indices = @transform_0, window_bounds = array<i64: 256, 32>}, {pipeline_mode = #tpu.pipeline_mode<synchronous>, transform_indices = @transform_1, window_bounds = array<i64: 32, 128>}, {transform_indices = @transform_2, window_bounds = array<i64: 256, 128>}]} {
    %c0 = arith.constant 0 : index
    %c0_0 = arith.constant 0 : index
    %0 = vector.load %arg1[%c0, %c0_0] : memref<256x32xbf16, #tpu.memory_space<vmem>>, vector<256x32xbf16>
    %c0_1 = arith.constant 0 : index
    %c0_2 = arith.constant 0 : index
    %1 = vector.load %arg2[%c0_1, %c0_2] : memref<32x128xbf16, #tpu.memory_space<vmem>>, vector<32x128xbf16>
    %cst = arith.constant dense<0.000000e+00> : vector<256x128xf32>
    %2 = tpu.matmul %0, %1, %cst {dimension_numbers = #tpu.dot_dimension_numbers<[1], [0], [0], [1], [0, 0, 1, 1], [], []>} : vector<256x32xbf16>, vector<32x128xbf16>, vector<256x128xf32> -> vector<256x128xf32>
    %3 = arith.truncf %2 : vector<256x128xf32> to vector<256x128xbf16>
    %c0_3 = arith.constant 0 : index
    %c0_4 = arith.constant 0 : index
    %4 = vector.load %arg3[%c0_3, %c0_4] : memref<256x128xbf16, #tpu.memory_space<vmem>>, vector<256x128xbf16>
    tpu.vector_store %arg3[%c0_3, %c0_4], %3 {strides = array<i32>} : memref<256x128xbf16, #tpu.memory_space<vmem>>, vector<256x128xbf16>,
    return
  }
  func.func @transform_0(%arg0: i32) -> (i32, i32) {
    %c0_i32 = arith.constant 0 : i32
    %c0_i32_0 = arith.constant 0 : i32
    return %arg0, %c0_i32 : i32, i32
  }
  func.func @transform_1(%arg0: i32) -> (i32, i32) {
    %c0_i32 = arith.constant 0 : i32
    %c0_i32_0 = arith.constant 0 : i32
    %c0_i32_1 = arith.constant 0 : i32
    return %c0_i32, %c0_i32_0 : i32, i32
  }
  func.func @transform_2(%arg0: i32) -> (i32, i32) {
    %c0_i32 = arith.constant 0 : i32
    %c0_i32_0 = arith.constant 0 : i32
    return %arg0, %c0_i32 : i32, i32
  }
}

</mosaic_0001>

<llo_original>
// kernel: tpu_custom_call.1
$region0: #{tpu_custom_call.1}
  #allocation0 [shape = 'u32[]', space=smem, size = 0x4, offset = 0x4, fixed_abs, tag = 'smem constant byte address 0x4 - core index']
  #allocation1 [shape = 'u32[144,128]{1,0:T(1,128)}', space=vmem, size = 0x12000, scoped, tag = 'internal scratch']
  %s0 = inlined_call_operand.vmem [shape: bf16[256,32], index: 0, kind: input, shape index: {}]
  %s1 = inlined_call_operand.vmem [shape: bf16[32,128], index: 1, kind: input, shape index: {}]
  %s2 = inlined_call_operand.hbm [shape: bf16[256,128], index: 2, kind: output, shape index: {}]
  %s3 = sld [smem:[#allocation0]]
  $region18: #{tpu_custom_call.1} parent=0
    _
  %s5 = ssub.s32 1, %s3
  %s6 = scalar_select 0, %s5, %s3
  $region1: #{tpu_custom_call.1} parent=0
    #allocation2 [shape = 'u8[65536]{0}', space=vmem, size = 0x10000, scoped, tag = 'output window, operand 0, single buffered']
    #allocation3 [shape = 's32[1]{0}', space=sflag, size = 0x4, scoped, tag = 'scoped memory for tpu_custom_call.1']
    %7 = vsyncpa [#allocation3], 0
    // Predicated region
    $region2: #{tpu_custom_call.1} parent=1 // pred_check
      _
    $region3: #{tpu_custom_call.1} parent=1 // pred_check_branch
      %9 = sbr.rel (0) target = $region5
    $region4: #{tpu_custom_call.1} parent=1 // pred_region
      _
    $region5: #{tpu_custom_call.1} parent=1 // pred_fallthru
      _
    // Predicated region
    $region6: #{tpu_custom_call.1} parent=1 // pred_check
      _
    $region7: #{tpu_custom_call.1} parent=1 // pred_check_branch
      %11 = sbr.rel (0) target = $region9
    $region8: #{tpu_custom_call.1} parent=1 // pred_region
      _
    $region9: #{tpu_custom_call.1} parent=1 // pred_fallthru
      _
    %v13 = vld [vmem:[%s0] sm:$0xf]
    %v14 = vld [vmem:[%s0 + $0x4] sm:$0xf]
    %v15 = vld [vmem:[%s0 + $0x8] sm:$0xf]
    %v16 = vld [vmem:[%s0 + $0xc] sm:$0xf]
    %v17 = vld [vmem:[%s0 + $0x10] sm:$0xf]
    %v18 = vld [vmem:[%s0 + $0x14] sm:$0xf]
    %v19 = vld [vmem:[%s0 + $0x18] sm:$0xf]
    %v20 = vld [vmem:[%s0 + $0x1c] sm:$0xf]
    %v21 = vld [vmem:[%s0 + $0x20] sm:$0xf]
    %v22 = vld [vmem:[%s0 + $0x24] sm:$0xf]
    %v23 = vld [vmem:[%s0 + $0x28] sm:$0xf]
    %v24 = vld [vmem:[%s0 + $0x2c] sm:$0xf]
    %v25 = vld [vmem:[%s0 + $0x30] sm:$0xf]
    %v26 = vld [vmem:[%s0 + $0x34] sm:$0xf]
    %v27 = vld [vmem:[%s0 + $0x38] sm:$0xf]
    %v28 = vld [vmem:[%s0 + $0x3c] sm:$0xf]
    %v29 = vld [vmem:[%s0 + $0x40] sm:$0xf]
    %v30 = vld [vmem:[%s0 + $0x44] sm:$0xf]
    %v31 = vld [vmem:[%s0 + $0x48] sm:$0xf]
    %v32 = vld [vmem:[%s0 + $0x4c] sm:$0xf]
    %v33 = vld [vmem:[%s0 + $0x50] sm:$0xf]
    %v34 = vld [vmem:[%s0 + $0x54] sm:$0xf]
    %v35 = vld [vmem:[%s0 + $0x58] sm:$0xf]
    %v36 = vld [vmem:[%s0 + $0x5c] sm:$0xf]
    %v37 = vld [vmem:[%s0 + $0x60] sm:$0xf]
    %v38 = vld [vmem:[%s0 + $0x64] sm:$0xf]
    %v39 = vld [vmem:[%s0 + $0x68] sm:$0xf]
    %v40 = vld [vmem:[%s0 + $0x6c] sm:$0xf]
    %v41 = vld [vmem:[%s0 + $0x70] sm:$0xf]
    %v42 = vld [vmem:[%s0 + $0x74] sm:$0xf]
    %v43 = vld [vmem:[%s0 + $0x78] sm:$0xf]
    %v44 = vld [vmem:[%s0 + $0x7c] sm:$0xf]
    %v45 = vld [vmem:[%s1] sm:$0xf]
    %v46 = vld [vmem:[%s1 + $0x4] sm:$0xf]
    %v47 = vld [vmem:[%s1 + $0x8] sm:$0xf]
    %v48 = vld [vmem:[%s1 + $0xc] sm:$0xf]
    %v81 = vunpack.c.l.b16 %v13
    %v82 = vunpack.c.l.b16 %v14
    %v83 = vunpack.c.l.b16 %v15
    %v84 = vunpack.c.l.b16 %v16
    %v85 = vunpack.c.l.b16 %v17
    %v86 = vunpack.c.l.b16 %v18
    %v87 = vunpack.c.l.b16 %v19
    %v88 = vunpack.c.l.b16 %v20
    %v89 = vunpack.c.l.b16 %v21
    %v90 = vunpack.c.l.b16 %v22
    %v91 = vunpack.c.l.b16 %v23
    %v92 = vunpack.c.l.b16 %v24
    %v93 = vunpack.c.l.b16 %v25
    %v94 = vunpack.c.l.b16 %v26
    %v95 = vunpack.c.l.b16 %v27
    %v96 = vunpack.c.l.b16 %v28
    %v97 = vunpack.c.l.b16 %v29
    %v98 = vunpack.c.l.b16 %v30
    %v99 = vunpack.c.l.b16 %v31
    %v100 = vunpack.c.l.b16 %v32
    %v101 = vunpack.c.l.b16 %v33
    %v102 = vunpack.c.l.b16 %v34
    %v103 = vunpack.c.l.b16 %v35
    %v104 = vunpack.c.l.b16 %v36
    %v105 = vunpack.c.l.b16 %v37
    %v106 = vunpack.c.l.b16 %v38
    %v107 = vunpack.c.l.b16 %v39
    %v108 = vunpack.c.l.b16 %v40
    %v109 = vunpack.c.l.b16 %v41
    %v110 = vunpack.c.l.b16 %v42
    %v111 = vunpack.c.l.b16 %v43
    %v112 = vunpack.c.l.b16 %v44
    %v113 = vpack.c.b16 %v82, %v81
    %v114 = vpack.c.b16 %v84, %v83
    %v115 = vpack.c.b16 %v86, %v85
    %v116 = vpack.c.b16 %v88, %v87
    %v117 = vpack.c.b16 %v90, %v89
    %v118 = vpack.c.b16 %v92, %v91
    %v119 = vpack.c.b16 %v94, %v93
    %v120 = vpack.c.b16 %v96, %v95
    %v121 = vpack.c.b16 %v98, %v97
    %v122 = vpack.c.b16 %v100, %v99
    %v123 = vpack.c.b16 %v102, %v101
    %v124 = vpack.c.b16 %v104, %v103
    %v125 = vpack.c.b16 %v106, %v105
    %v126 = vpack.c.b16 %v108, %v107
    %v127 = vpack.c.b16 %v110, %v109
    %v128 = vpack.c.b16 %v112, %v111
    %v133 = vunpack.c.l.b16 %v45
    %v134 = vunpack.c.l.b16 %v46
    %v135 = vunpack.c.l.b16 %v47
    %v136 = vunpack.c.l.b16 %v48
    %v137 = vpack.c.b16 %v134, %v133
    %v138 = vpack.c.b16 %v136, %v135
    %vm141 = vcmask 261120
    %v143 = vsel %vm141, %v113, 0
    %v146 = vsel %vm141, %v114, 0
    %v149 = vsel %vm141, %v115, 0
    %v152 = vsel %vm141, %v116, 0
    %v155 = vsel %vm141, %v117, 0
    %v158 = vsel %vm141, %v118, 0
    %v161 = vsel %vm141, %v119, 0
    %v164 = vsel %vm141, %v120, 0
    %v167 = vsel %vm141, %v121, 0
    %v170 = vsel %vm141, %v122, 0
    %v173 = vsel %vm141, %v123, 0
    %v176 = vsel %vm141, %v124, 0
    %v179 = vsel %vm141, %v125, 0
    %v182 = vsel %vm141, %v126, 0
    %v185 = vsel %vm141, %v127, 0
    %v188 = vsel %vm141, %v128, 0
    %190 = vmatprep.subr.bf16.mxu0 0
    %191 = vmatpush1.bf16.msra.mxu0 0
    %192 = vmatprep.subr.bf16.mxu0 0
    %193 = vmatpush1.bf16.msra.mxu0 0
    %194 = vmatprep.subr.bf16.mxu0 0
    %195 = vmatpush1.bf16.msra.mxu0 0
    %196 = vmatprep.subr.bf16.mxu0 0
    %197 = vmatpush1.bf16.msra.mxu0 0
    %198 = vmatprep.subr.bf16.mxu0 0
    %199 = vmatpush1.bf16.msra.mxu0 0
    %200 = vmatprep.subr.bf16.mxu0 0
    %201 = vmatpush1.bf16.msra.mxu0 0
    %202 = vmatprep.subr.bf16.mxu0 0
    %203 = vmatpush1.bf16.msra.mxu0 %v138
    %204 = vmatprep.subr.bf16.mxu0 0
    %205 = vmatpush1.bf16.msra.mxu0 %v137
    %206 = vmatprep.subr.bf16.mxu0 0
    %207 = vmatpush2.bf16.msra.mxu0 0
    %208 = vmatprep.subr.bf16.mxu0 0
    %209 = vmatpush2.bf16.msra.mxu0 0
    %210 = vmatprep.subr.bf16.mxu0 0
    %211 = vmatpush2.bf16.msra.mxu0 0
    %212 = vmatprep.subr.bf16.mxu0 0
    %213 = vmatpush2.bf16.msra.mxu0 0
    %214 = vmatprep.subr.bf16.mxu0 0
    %215 = vmatpush2.bf16.msra.mxu0 0
    %216 = vmatprep.subr.bf16.mxu0 0
    %217 = vmatpush2.bf16.msra.mxu0 0
    %218 = vmatprep.subr.bf16.mxu0 0
    %219 = vmatpush2.bf16.msra.mxu0 0
    %220 = vmatprep.subr.bf16.mxu0 0
    %221 = vmatpush2.bf16.msra.mxu0 0
    %222 = vmatprep.mubr.bf16.mxu0 0
    %223 = vmatmul.mubr.bf16.gmra.mxu0 %v143
    %v224 = vpop.f32.mrf.mxu0
    %v225 = vadd.f32 0.0, %v224
    %v226 = vpop.f32.mrf.mxu0
    %v227 = vpop.f32.mrf.mxu0
    %v228 = vadd.f32 0.0, %v227
    %v229 = vpop.f32.mrf.mxu0
    %230 = vmatprep.mubr.bf16.mxu0 0
    %231 = vmatmul.mubr.bf16.gmra.mxu0 %v146
    %v232 = vpop.f32.mrf.mxu0
    %v233 = vadd.f32 0.0, %v232
    %v234 = vpop.f32.mrf.mxu0
    %v235 = vpop.f32.mrf.mxu0
    %v236 = vadd.f32 0.0, %v235
    %v237 = vpop.f32.mrf.mxu0
    %238 = vmatprep.mubr.bf16.mxu0 0
    %239 = vmatmul.mubr.bf16.gmra.mxu0 %v149
    %v240 = vpop.f32.mrf.mxu0
    %v241 = vadd.f32 0.0, %v240
    %v242 = vpop.f32.mrf.mxu0
    %v243 = vpop.f32.mrf.mxu0
    %v244 = vadd.f32 0.0, %v243
    %v245 = vpop.f32.mrf.mxu0
    %246 = vmatprep.mubr.bf16.mxu0 0
    %247 = vmatmul.mubr.bf16.gmra.mxu0 %v152
    %v248 = vpop.f32.mrf.mxu0
    %v249 = vadd.f32 0.0, %v248
    %v250 = vpop.f32.mrf.mxu0
    %v251 = vpop.f32.mrf.mxu0
    %v252 = vadd.f32 0.0, %v251
    %v253 = vpop.f32.mrf.mxu0
    %254 = vmatprep.mubr.bf16.mxu0 0
    %255 = vmatmul.mubr.bf16.gmra.mxu0 %v155
    %v256 = vpop.f32.mrf.mxu0
    %v257 = vadd.f32 0.0, %v256
    %v258 = vpop.f32.mrf.mxu0
    %v259 = vpop.f32.mrf.mxu0
    %v260 = vadd.f32 0.0, %v259
    %v261 = vpop.f32.mrf.mxu0
    %262 = vmatprep.mubr.bf16.mxu0 0
    %263 = vmatmul.mubr.bf16.gmra.mxu0 %v158
    %v264 = vpop.f32.mrf.mxu0
    %v265 = vadd.f32 0.0, %v264
    %v266 = vpop.f32.mrf.mxu0
    %v267 = vpop.f32.mrf.mxu0
    %v268 = vadd.f32 0.0, %v267
    %v269 = vpop.f32.mrf.mxu0
    %270 = vmatprep.mubr.bf16.mxu0 0
    %271 = vmatmul.mubr.bf16.gmra.mxu0 %v161
    %v272 = vpop.f32.mrf.mxu0
    %v273 = vadd.f32 0.0, %v272
    %v274 = vpop.f32.mrf.mxu0
    %v275 = vpop.f32.mrf.mxu0
    %v276 = vadd.f32 0.0, %v275
    %v277 = vpop.f32.mrf.mxu0
    %278 = vmatprep.mubr.bf16.mxu0 0
    %279 = vmatmul.mubr.bf16.gmra.mxu0 %v164
    %v280 = vpop.f32.mrf.mxu0
    %v281 = vadd.f32 0.0, %v280
    %v282 = vpop.f32.mrf.mxu0
    %v283 = vpop.f32.mrf.mxu0
    %v284 = vadd.f32 0.0, %v283
    %v285 = vpop.f32.mrf.mxu0
    %286 = vmatprep.mubr.bf16.mxu0 0
    %287 = vmatmul.mubr.bf16.gmra.mxu0 %v167
    %v288 = vpop.f32.mrf.mxu0
    %v289 = vadd.f32 0.0, %v288
    %v290 = vpop.f32.mrf.mxu0
    %v291 = vpop.f32.mrf.mxu0
    %v292 = vadd.f32 0.0, %v291
    %v293 = vpop.f32.mrf.mxu0
    %294 = vmatprep.mubr.bf16.mxu0 0
    %295 = vmatmul.mubr.bf16.gmra.mxu0 %v170
    %v296 = vpop.f32.mrf.mxu0
    %v297 = vadd.f32 0.0, %v296
    %v298 = vpop.f32.mrf.mxu0
    %v299 = vpop.f32.mrf.mxu0
    %v300 = vadd.f32 0.0, %v299
    %v301 = vpop.f32.mrf.mxu0
    %302 = vmatprep.mubr.bf16.mxu0 0
    %303 = vmatmul.mubr.bf16.gmra.mxu0 %v173
    %v304 = vpop.f32.mrf.mxu0
    %v305 = vadd.f32 0.0, %v304
    %v306 = vpop.f32.mrf.mxu0
    %v307 = vpop.f32.mrf.mxu0
    %v308 = vadd.f32 0.0, %v307
    %v309 = vpop.f32.mrf.mxu0
    %310 = vmatprep.mubr.bf16.mxu0 0
    %311 = vmatmul.mubr.bf16.gmra.mxu0 %v176
    %v312 = vpop.f32.mrf.mxu0
    %v313 = vadd.f32 0.0, %v312
    %v314 = vpop.f32.mrf.mxu0
    %v315 = vpop.f32.mrf.mxu0
    %v316 = vadd.f32 0.0, %v315
    %v317 = vpop.f32.mrf.mxu0
    %318 = vmatprep.mubr.bf16.mxu0 0
    %319 = vmatmul.mubr.bf16.gmra.mxu0 %v179
    %v320 = vpop.f32.mrf.mxu0
    %v321 = vadd.f32 0.0, %v320
    %v322 = vpop.f32.mrf.mxu0
    %v323 = vpop.f32.mrf.mxu0
    %v324 = vadd.f32 0.0, %v323
    %v325 = vpop.f32.mrf.mxu0
    %326 = vmatprep.mubr.bf16.mxu0 0
    %327 = vmatmul.mubr.bf16.gmra.mxu0 %v182
    %v328 = vpop.f32.mrf.mxu0
    %v329 = vadd.f32 0.0, %v328
    %v330 = vpop.f32.mrf.mxu0
    %v331 = vpop.f32.mrf.mxu0
    %v332 = vadd.f32 0.0, %v331
    %v333 = vpop.f32.mrf.mxu0
    %334 = vmatprep.mubr.bf16.mxu0 0
    %335 = vmatmul.mubr.bf16.gmra.mxu0 %v185
    %v336 = vpop.f32.mrf.mxu0
    %v337 = vadd.f32 0.0, %v336
    %v338 = vpop.f32.mrf.mxu0
    %v339 = vpop.f32.mrf.mxu0
    %v340 = vadd.f32 0.0, %v339
    %v341 = vpop.f32.mrf.mxu0
    %342 = vmatprep.mubr.bf16.mxu0 0
    %343 = vmatmul.mubr.bf16.gmra.mxu0 %v188
    %v344 = vpop.f32.mrf.mxu0
    %v345 = vadd.f32 0.0, %v344
    %v346 = vpop.f32.mrf.mxu0
    %v347 = vpop.f32.mrf.mxu0
    %v348 = vadd.f32 0.0, %v347
    %v349 = vpop.f32.mrf.mxu0
    %350 = vdwg.mxu0
    %v351 = vpack.c.bf16 %v228, %v225
    %v352 = vpack.c.bf16 %v236, %v233
    %v353 = vpack.c.bf16 %v244, %v241
    %v354 = vpack.c.bf16 %v252, %v249
    %v355 = vpack.c.bf16 %v260, %v257
    %v356 = vpack.c.bf16 %v268, %v265
    %v357 = vpack.c.bf16 %v276, %v273
    %v358 = vpack.c.bf16 %v284, %v281
    %v359 = vpack.c.bf16 %v292, %v289
    %v360 = vpack.c.bf16 %v300, %v297
    %v361 = vpack.c.bf16 %v308, %v305
    %v362 = vpack.c.bf16 %v316, %v313
    %v363 = vpack.c.bf16 %v324, %v321
    %v364 = vpack.c.bf16 %v332, %v329
    %v365 = vpack.c.bf16 %v340, %v337
    %v366 = vpack.c.bf16 %v348, %v345
    %v383 = vunpack.c.l.b16 %v351
    %v384 = vunpack.c.h.b16 %v351
    %v385 = vunpack.c.l.b16 %v352
    %v386 = vunpack.c.h.b16 %v352
    %v387 = vunpack.c.l.b16 %v353
    %v388 = vunpack.c.h.b16 %v353
    %v389 = vunpack.c.l.b16 %v354
    %v390 = vunpack.c.h.b16 %v354
    %v391 = vunpack.c.l.b16 %v355
    %v392 = vunpack.c.h.b16 %v355
    %v393 = vunpack.c.l.b16 %v356
    %v394 = vunpack.c.h.b16 %v356
    %v395 = vunpack.c.l.b16 %v357
    %v396 = vunpack.c.h.b16 %v357
    %v397 = vunpack.c.l.b16 %v358
    %v398 = vunpack.c.h.b16 %v358
    %v399 = vunpack.c.l.b16 %v359
    %v400 = vunpack.c.h.b16 %v359
    %v401 = vunpack.c.l.b16 %v360
    %v402 = vunpack.c.h.b16 %v360
    %v403 = vunpack.c.l.b16 %v361
    %v404 = vunpack.c.h.b16 %v361
    %v405 = vunpack.c.l.b16 %v362
    %v406 = vunpack.c.h.b16 %v362
    %v407 = vunpack.c.l.b16 %v363
    %v408 = vunpack.c.h.b16 %v363
    %v409 = vunpack.c.l.b16 %v364
    %v410 = vunpack.c.h.b16 %v364
    %v411 = vunpack.c.l.b16 %v365
    %v412 = vunpack.c.h.b16 %v365
    %v413 = vunpack.c.l.b16 %v366
    %v414 = vunpack.c.h.b16 %v366
    %v415 = vpack.c.b16 %v383, %v383
    %v416 = vpack.c.b16 %v384, %v384
    %v417 = vpack.c.b16 %v385, %v385
    %v418 = vpack.c.b16 %v386, %v386
    %v419 = vpack.c.b16 %v387, %v387
    %v420 = vpack.c.b16 %v388, %v388
    %v421 = vpack.c.b16 %v389, %v389
    %v422 = vpack.c.b16 %v390, %v390
    %v423 = vpack.c.b16 %v391, %v391
    %v424 = vpack.c.b16 %v392, %v392
    %v425 = vpack.c.b16 %v393, %v393
    %v426 = vpack.c.b16 %v394, %v394
    %v427 = vpack.c.b16 %v395, %v395
    %v428 = vpack.c.b16 %v396, %v396
    %v429 = vpack.c.b16 %v397, %v397
    %v430 = vpack.c.b16 %v398, %v398
    %v431 = vpack.c.b16 %v399, %v399
    %v432 = vpack.c.b16 %v400, %v400
    %v433 = vpack.c.b16 %v401, %v401
    %v434 = vpack.c.b16 %v402, %v402
    %v435 = vpack.c.b16 %v403, %v403
    %v436 = vpack.c.b16 %v404, %v404
    %v437 = vpack.c.b16 %v405, %v405
    %v438 = vpack.c.b16 %v406, %v406
    %v439 = vpack.c.b16 %v407, %v407
    %v440 = vpack.c.b16 %v408, %v408
    %v441 = vpack.c.b16 %v409, %v409
    %v442 = vpack.c.b16 %v410, %v410
    %v443 = vpack.c.b16 %v411, %v411
    %v444 = vpack.c.b16 %v412, %v412
    %v445 = vpack.c.b16 %v413, %v413
    %v446 = vpack.c.b16 %v414, %v414
    %479 = vst [vmem:[#allocation2] sm:$0xf] %v415
    %480 = vst [vmem:[#allocation2 + $0x4] sm:$0xf] %v416
    %481 = vst [vmem:[#allocation2 + $0x8] sm:$0xf] %v417
    %482 = vst [vmem:[#allocation2 + $0xc] sm:$0xf] %v418
    %483 = vst [vmem:[#allocation2 + $0x10] sm:$0xf] %v419
    %484 = vst [vmem:[#allocation2 + $0x14] sm:$0xf] %v420
    %485 = vst [vmem:[#allocation2 + $0x18] sm:$0xf] %v421
    %486 = vst [vmem:[#allocation2 + $0x1c] sm:$0xf] %v422
    %487 = vst [vmem:[#allocation2 + $0x20] sm:$0xf] %v423
    %488 = vst [vmem:[#allocation2 + $0x24] sm:$0xf] %v424
    %489 = vst [vmem:[#allocation2 + $0x28] sm:$0xf] %v425
    %490 = vst [vmem:[#allocation2 + $0x2c] sm:$0xf] %v426
    %491 = vst [vmem:[#allocation2 + $0x30] sm:$0xf] %v427
    %492 = vst [vmem:[#allocation2 + $0x34] sm:$0xf] %v428
    %493 = vst [vmem:[#allocation2 + $0x38] sm:$0xf] %v429
    %494 = vst [vmem:[#allocation2 + $0x3c] sm:$0xf] %v430
    %495 = vst [vmem:[#allocation2 + $0x40] sm:$0xf] %v431
    %496 = vst [vmem:[#allocation2 + $0x44] sm:$0xf] %v432
    %497 = vst [vmem:[#allocation2 + $0x48] sm:$0xf] %v433
    %498 = vst [vmem:[#allocation2 + $0x4c] sm:$0xf] %v434
    %499 = vst [vmem:[#allocation2 + $0x50] sm:$0xf] %v435
    %500 = vst [vmem:[#allocation2 + $0x54] sm:$0xf] %v436
    %501 = vst [vmem:[#allocation2 + $0x58] sm:$0xf] %v437
    %502 = vst [vmem:[#allocation2 + $0x5c] sm:$0xf] %v438
    %503 = vst [vmem:[#allocation2 + $0x60] sm:$0xf] %v439
    %504 = vst [vmem:[#allocation2 + $0x64] sm:$0xf] %v440
    %505 = vst [vmem:[#allocation2 + $0x68] sm:$0xf] %v441
    %506 = vst [vmem:[#allocation2 + $0x6c] sm:$0xf] %v442
    %507 = vst [vmem:[#allocation2 + $0x70] sm:$0xf] %v443
    %508 = vst [vmem:[#allocation2 + $0x74] sm:$0xf] %v444
    %509 = vst [vmem:[#allocation2 + $0x78] sm:$0xf] %v445
    %510 = vst [vmem:[#allocation2 + $0x7c] sm:$0xf] %v446
    // Predicated region
    $region10: #{tpu_custom_call.1} parent=1 // pred_check
      _
    $region11: #{tpu_custom_call.1} parent=1 // pred_check_branch
      %512 = sbr.rel (0) target = $region13
    $region12: #{tpu_custom_call.1} parent=1 // pred_region
      %s514 = ssub.s32 2048, 2048
      %515 = vsyncadd [#allocation3], %s514
      %s516 = sshll.u32 [#allocation2], 4
      %s517 = int_to_ptr.vmem [resolvable:$true] %s516
      %522 = dma.vmem_to_hbm [thread:$0]  %s517, 2048, %s2, [#allocation3], 64, 64, 4
    $region13: #{tpu_custom_call.1} parent=1 // pred_fallthru
      _
    // Predicated region
    $region14: #{tpu_custom_call.1} parent=1 // pred_check
      _
    $region15: #{tpu_custom_call.1} parent=1 // pred_check_branch
      %524 = sbr.rel (0) target = $region17
    $region16: #{tpu_custom_call.1} parent=1 // pred_region
      %525 = dma.done [#allocation3], 2048
    $region17: #{tpu_custom_call.1} parent=1 // pred_fallthru
      _
    %526 = vsyncpa [#allocation3], 1

</llo_original>
